<compile_context>
chip_gen: v7x
topology: tpu7x:2x2x1
jax: 0.10.0
libtpu: 0.0.40
codegen_flags: <defaults>
</compile_context>

<pallas_src>
import functools
import math

import jax
import jax.numpy as jnp
from jax import lax
from jax.experimental import pallas as pl
from jax.experimental.pallas import tpu as pltpu


# ---------------------------------------------------------------------------
# Per-chip defaults
# ---------------------------------------------------------------------------

def _device_kind_lower():
    try:
        return jax.devices()[0].device_kind.lower()
    except Exception:
        return ""


def _default_exp_dtype():
    kind = _device_kind_lower()
    if ("v6" in kind) or ("v7" in kind):
        return jnp.bfloat16        # bf16-capable EUP: packed exp throughput
    return jnp.float32             # v5e and older: no bf16 EUP


def _default_row_tile():
    kind = _device_kind_lower()
    return 128 if "v7" in kind else 256   # v7x has 64 MiB VMEM per TC


def _default_vmem_limit_bytes():
    kind = _device_kind_lower()
    if "v7" in kind:
        return 48 * 1024 * 1024
    if ("v5" in kind) or ("v6" in kind):
        return 96 * 1024 * 1024
    return None                    # unknown chip: keep the compiler default


# ---------------------------------------------------------------------------
# Kernel bodies
# ---------------------------------------------------------------------------

def _tile_logits(anchor_ref, contrast_ref):
    """Scaled logits for the current row tile + row/col index machinery."""
    i = pl.program_id(0)
    tq = anchor_ref.shape[0]
    n = contrast_ref.shape[0]

    # anchor already carries the 1/temperature scale (host-side, pre-bf16-cast)
    logits_raw = lax.dot_general(                       # NT form, f32 accumulate
        anchor_ref[...], contrast_ref[...],
        dimension_numbers=(((1,), (1,)), ((), ())),
        preferred_element_type=jnp.float32)             # [TQ, N]

    rows = lax.broadcasted_iota(jnp.int32, (tq, 1), 0) + i * tq   # global rows
    cols = lax.broadcasted_iota(jnp.int32, (tq, n), 1)
    off_diag = cols != rows                             # [TQ, N] bool
    return logits_raw, rows, off_diag


def _tile_reduce_and_store(logits_raw, pos, off_diag, rows, o_ref, *,
                           n_anchor, temperature, base_temperature,
                           epsilon, alpha, exp_dtype):
    """Fold the IFM loss for one row tile and store the lane-dense partial."""
    # Numerical stabilization: max over the FULL row (incl. diagonal), as torch.
    logits_max = jnp.max(logits_raw, axis=1, keepdims=True)
    logits = logits_raw - logits_max                    # <= 0

    # Single N^2 transcendental pass; bf16 on v6e/v7x EUP, sums stay f32.
    exp_l = jnp.exp(logits.astype(exp_dtype)).astype(jnp.float32)

    neg = jnp.logical_xor(off_diag, pos)                # off-diagonal negatives
    s_em = jnp.sum(jnp.where(pos, exp_l, 0.0), axis=1, keepdims=True)
    s_neg = jnp.sum(jnp.where(neg, exp_l, 0.0), axis=1, keepdims=True)
    s_ml = jnp.sum(jnp.where(pos, logits, 0.0), axis=1, keepdims=True)
    mask_sum = jnp.sum(jnp.where(pos, 1.0, 0.0), axis=1, keepdims=True)

    shift = epsilon / temperature
    e_pos = math.exp(shift)
    e_neg = math.exp(-shift)
    z = s_em + s_neg                                    # softmax denominator
    z_adv = e_neg * s_em + e_pos * s_neg                # folded IFM denominator

    # sum(m*log_prob)     = s_ml - mask_sum*log(z)
    # sum(m*log_prob_adv) = s_ml - mask_sum*shift - mask_sum*log(z_adv)
    mean_pos_logits = s_ml / mask_sum    # NaN for anchors w/o positives (== torch)
    mean_lpp = mean_pos_logits - jnp.log(z)
    mean_lppa = mean_pos_logits - shift - jnp.log(z_adv)

    w = -(temperature / base_temperature) / (1.0 + alpha)
    per_row = w * (mean_lpp + alpha * mean_lppa)        # [TQ, 1]

    row_valid = rows < n_anchor                         # mask cdiv-padded rows
    tile_sum = jnp.sum(jnp.where(row_valid, per_row, 0.0))
    o_ref[...] = jnp.full((1, 128), tile_sum, dtype=jnp.float32)


def _supcon_ifm_labels_kernel(lab_row_ref, lab_col_ref, anchor_ref, contrast_ref,
                              o_ref, *, n_anchor, temperature, base_temperature,
                              epsilon, alpha, exp_dtype):
    logits_raw, rows, off_diag = _tile_logits(anchor_ref, contrast_ref)
    same_label = lab_row_ref[...] == lab_col_ref[...]   # (TQ,1)==(1,N) -> (TQ,N)
    pos = jnp.logical_and(same_label, off_diag)
    _tile_reduce_and_store(logits_raw, pos, off_diag, rows, o_ref,
                           n_anchor=n_anchor, temperature=temperature,
                           base_temperature=base_temperature,
                           epsilon=epsilon, alpha=alpha, exp_dtype=exp_dtype)


def _supcon_ifm_mask_kernel(mask_ref, anchor_ref, contrast_ref, o_ref, *,
                            n_anchor, temperature, base_temperature,
                            epsilon, alpha, exp_dtype):
    logits_raw, rows, off_diag = _tile_logits(anchor_ref, contrast_ref)
    pos = jnp.logical_and(mask_ref[...] != 0, off_diag)   # int8-streamed mask
    _tile_reduce_and_store(logits_raw, pos, off_diag, rows, o_ref,
                           n_anchor=n_anchor, temperature=temperature,
                           base_temperature=base_temperature,
                           epsilon=epsilon, alpha=alpha, exp_dtype=exp_dtype)


# ---------------------------------------------------------------------------
# Wrapper
# ---------------------------------------------------------------------------

def supcon_loss_ifm(features, labels=None, mask=None, *, temperature=0.07,
                    contrast_mode='all', base_temperature=0.07, epsilon=0.1,
                    alpha=1.0, matmul_dtype=jnp.bfloat16, exp_dtype=None,
                    row_tile=None):
    """JAX/Pallas equivalent of SupConLossIFM.forward (before_stab=False)."""
    features = jnp.asarray(features)
    if features.ndim < 3:
        raise ValueError('`features` needs to be [bsz, n_views, ...]')
    if features.ndim > 3:
        features = features.reshape(features.shape[0], features.shape[1], -1)
    if labels is not None and mask is not None:
        raise ValueError('Cannot define both `labels` and `mask`')
    if contrast_mode not in ('all', 'one'):
        raise ValueError('Unknown mode: {}'.format(contrast_mode))
    if exp_dtype is None:
        exp_dtype = _default_exp_dtype()
    if row_tile is None:
        row_tile = _default_row_tile()

    bsz, n_views, dim = features.shape
    n_total = n_views * bsz
    n_anchor = n_total if contrast_mode == 'all' else bsz

    # contrast_feature = cat(unbind(features, dim=1), dim=0) : [n_views*bsz, dim]
    feats2d = jnp.transpose(features, (1, 0, 2)).reshape(n_total, dim)
    feats2d = feats2d.astype(jnp.float32)
    contrast = feats2d.astype(matmul_dtype)
    # Fold 1/T into the anchor BEFORE the narrow cast (relative precision kept,
    # MXU gets narrow operands, no in-kernel N^2 scaling pass).
    anchor = (feats2d * (1.0 / float(temperature))).astype(matmul_dtype)[:n_anchor]

    tq = n_anchor if n_anchor <= row_tile else row_tile
    num_tiles = int(pl.cdiv(n_anchor, tq))

    anchor_spec = pl.BlockSpec((tq, dim), lambda i: (i, 0))
    contrast_spec = pl.BlockSpec((n_total, dim), lambda i: (0, 0))
    out_spec = pl.BlockSpec((1, 128), lambda i: (0, i))       # lane-dense partials
    out_shape = jax.ShapeDtypeStruct((1, num_tiles * 128), jnp.float32)
    cparams = pltpu.CompilerParams(
        dimension_semantics=("parallel",),
        vmem_limit_bytes=_default_vmem_limit_bytes())
    static = dict(n_anchor=n_anchor, temperature=float(temperature),
                  base_temperature=float(base_temperature),
                  epsilon=float(epsilon), alpha=float(alpha),
                  exp_dtype=exp_dtype)

    if mask is None:
        # Labels path (or SimCLR eye path == labels = arange(bsz)):
        # mask rebuilt in-kernel from per-row labels -> no N^2 mask DMA.
        if labels is None:
            row_labels = jnp.tile(jnp.arange(bsz, dtype=jnp.int32), n_views)
        else:
            labels = jnp.asarray(labels).reshape(-1)
            if labels.shape[0] != bsz:
                raise ValueError('Num of labels does not match num of features')
            row_labels = jnp.tile(labels.astype(jnp.int32), n_views)
        lab_row = row_labels[:n_anchor].reshape(n_anchor, 1)
        lab_col = row_labels.reshape(1, n_total)

        kernel = functools.partial(_supcon_ifm_labels_kernel, **static)
        out = pl.pallas_call(
            kernel,
            out_shape=out_shape,
            grid_spec=pltpu.PrefetchScalarGridSpec(
                num_scalar_prefetch=0,
                grid=(num_tiles,),
                in_specs=[
                    pl.BlockSpec((tq, 1), lambda i: (i, 0)),
                    pl.BlockSpec((1, n_total), lambda i: (0, 0)),
                    anchor_spec,
                    contrast_spec,
                ],
                out_specs=out_spec,
            ),
            compiler_params=cparams,
        )(lab_row, lab_col, anchor, contrast)
    else:
        # Explicit (possibly asymmetric) binary mask: streamed row-tile-wise as int8.
        reps_rows = n_views if contrast_mode == 'all' else 1
        full_mask = jnp.tile((jnp.asarray(mask) > 0).astype(jnp.int8),
                             (reps_rows, n_views))
        kernel = functools.partial(_supcon_ifm_mask_kernel, **static)
        out = pl.pallas_call(
            kernel,
            out_shape=out_shape,
            grid_spec=pltpu.PrefetchScalarGridSpec(
                num_scalar_prefetch=0,
                grid=(num_tiles,),
                in_specs=[
                    pl.BlockSpec((tq, n_total), lambda i: (i, 0)),
                    anchor_spec,
                    contrast_spec,
                ],
                out_specs=out_spec,
            ),
            compiler_params=cparams,
        )(full_mask, anchor, contrast)

    partials = out.reshape(num_tiles, 128)[:, 0]
    return jnp.sum(partials) / n_anchor


# ---------------------------------------------------------------------------
# Pure-JAX reference (mirrors the PyTorch forward, before_stab=False)
# ---------------------------------------------------------------------------

def _supcon_loss_ifm_ref(features, labels=None, mask=None, *, temperature,
                         base_temperature, epsilon, alpha, contrast_mode='all'):
    bsz, n_views, dim = features.shape
    f = jnp.transpose(features, (1, 0, 2)).reshape(n_views * bsz, dim)
    f = f.astype(jnp.float32)
    if labels is None and mask is None:
        base_mask = jnp.eye(bsz, dtype=jnp.float32)
    elif labels is not None:
        labels = jnp.asarray(labels).reshape(-1, 1)
        base_mask = (labels == labels.T).astype(jnp.float32)
    else:
        base_mask = jnp.asarray(mask, dtype=jnp.float32)
    anchor_count = 1 if contrast_mode == 'one' else n_views
    anchor = f[:bsz] if contrast_mode == 'one' else f
    n_a = anchor_count * bsz
    n_c = n_views * bsz
    m = jnp.tile(base_mask, (anchor_count, n_views))
    logits_mask = 1.0 - (jnp.arange(n_a)[:, None] ==
                         jnp.arange(n_c)[None, :]).astype(jnp.float32)
    m = m * logits_mask
    adc = jnp.dot(anchor, f.T, precision=jax.lax.Precision.HIGHEST) / temperature
    logits = adc - jnp.max(adc, axis=1, keepdims=True)
    shift = epsilon / temperature
    logits_adv = jnp.where(m == 1, logits - shift, logits + shift)
    exp_l = jnp.exp(logits) * logits_mask
    exp_la = jnp.exp(logits_adv) * logits_mask
    lp = logits - jnp.log(exp_l.sum(1, keepdims=True))
    lpa = logits_adv - jnp.log(exp_la.sum(1, keepdims=True))
    ms = m.sum(1)
    mlpp = (m * lp).sum(1) / ms
    mlppa = (m * lpa).sum(1) / ms
    s = -(temperature / base_temperature)
    return (jnp.mean(s * mlpp) + alpha * jnp.mean(s * mlppa)) / (1.0 + alpha)


# ---------------------------------------------------------------------------
# Demo / self-check
# ---------------------------------------------------------------------------

if __name__ == "__main__":
    key = jax.random.PRNGKey(0)
    (k_feat,) = jax.random.split(key, 1)

    bsz, n_views, dim = 8, 2, 32
    feats = jax.random.normal(k_feat, (bsz, n_views, dim), dtype=jnp.float32)
    # L2-normalize features along the last dim (standard for SupCon inputs).
    feats = feats / jnp.linalg.norm(feats, axis=-1, keepdims=True)
    labels = jnp.array([0, 1, 0, 1, 2, 2, 0, 1], dtype=jnp.int32)

    hp = dict(temperature=0.07, base_temperature=0.07, epsilon=0.1, alpha=1.0)

    ref_all = _supcon_loss_ifm_ref(feats, labels=labels, contrast_mode='all', **hp)
    ref_one = _supcon_loss_ifm_ref(feats, labels=labels, contrast_mode='one', **hp)

    # 1) Tight algebra check: f32 MXU + f32 exp.
    loss_f32 = supcon_loss_ifm(feats, labels=labels, matmul_dtype=jnp.float32,
                               exp_dtype=jnp.float32, **hp)
    jax.block_until_ready(loss_f32)
    assert jnp.isfinite(loss_f32)
    assert jnp.allclose(loss_f32, ref_all, rtol=1e-3, atol=1e-3), (loss_f32, ref_all)

    # 2) Default fast path: bf16 MXU (+ bf16 exp on v6e/v7x) -> looser tolerance.
    loss_fast = supcon_loss_ifm(feats, labels=labels, **hp)
    jax.block_until_ready(loss_fast)
    assert jnp.isfinite(loss_fast)
    assert jnp.allclose(loss_fast, ref_all, rtol=5e-2, atol=5e-2), (loss_fast, ref_all)

    # 3) Explicit-mask path (int8-streamed mask) reproduces the labels result.
    msk = (labels[:, None] == labels[None, :]).astype(jnp.float32)
    loss_mask = supcon_loss_ifm(feats, mask=msk, **hp)
    jax.block_until_ready(loss_mask)
    assert jnp.allclose(loss_mask, ref_all, rtol=5e-2, atol=5e-2), (loss_mask, ref_all)

    # 4) contrast_mode='one'.
    loss_one = supcon_loss_ifm(feats, labels=labels, contrast_mode='one', **hp)
    jax.block_until_ready(loss_one)
    assert jnp.allclose(loss_one, ref_one, rtol=5e-2, atol=5e-2), (loss_one, ref_one)

    print("KERNEL_OK")
</pallas_src>

<mosaic_0001>
module attributes {stable_mosaic.version = 11 : i64} {
  func.func @_supcon_ifm_labels_kernel(%arg0: i32, %arg1: memref<16x1xi32, #tpu.memory_space<vmem>>, %arg2: memref<1x16xi32, #tpu.memory_space<vmem>>, %arg3: memref<16x32xf32, #tpu.memory_space<vmem>>, %arg4: memref<16x32xf32, #tpu.memory_space<vmem>>, %arg5: memref<1x128xf32, #tpu.memory_space<vmem>>) attributes {dimension_semantics = [#tpu.dimension_semantics<parallel>], iteration_bounds = array<i64: 1>, scalar_prefetch = 0 : i64, scratch_operands = 0 : i64, tpu.core_type = #tpu.core_type<tc>, window_params = [{transform_indices = @transform_0, window_bounds = array<i64: 16, 1>}, {pipeline_mode = #tpu.pipeline_mode<synchronous>, transform_indices = @transform_1, window_bounds = array<i64: 1, 16>}, {transform_indices = @transform_2, window_bounds = array<i64: 16, 32>}, {pipeline_mode = #tpu.pipeline_mode<synchronous>, transform_indices = @transform_3, window_bounds = array<i64: 16, 32>}, {transform_indices = @transform_4, window_bounds = array<i64: 1, 128>}]} {
    %c0 = arith.constant 0 : index
    %c0_0 = arith.constant 0 : index
    %0 = vector.load %arg3[%c0, %c0_0] : memref<16x32xf32, #tpu.memory_space<vmem>>, vector<16x32xf32>
    %c0_1 = arith.constant 0 : index
    %c0_2 = arith.constant 0 : index
    %1 = vector.load %arg4[%c0_1, %c0_2] : memref<16x32xf32, #tpu.memory_space<vmem>>, vector<16x32xf32>
    %cst = arith.constant dense<0.000000e+00> : vector<16x16xf32>
    %2 = tpu.matmul %0, %1, %cst {dimension_numbers = #tpu.dot_dimension_numbers<[1], [1], [0], [0], [0, 0, 1, 0], [], []>} : vector<16x32xf32>, vector<16x32xf32>, vector<16x16xf32> -> vector<16x16xf32>
    %3 = tpu.iota {dimensions = array<i32: 0>} : vector<16x1xi32>
    %c16_i32 = arith.constant 16 : i32
    %4 = arith.muli %arg0, %c16_i32 : i32
    %5 = vector.broadcast %4 : i32 to vector<16x1xi32>
    %6 = arith.addi %3, %5 : vector<16x1xi32>
    %7 = tpu.iota {dimensions = array<i32: 1>} : vector<16x16xi32>
    %8 = vector.broadcast %6 : vector<16x1xi32> to vector<16x16xi32>
    %9 = arith.cmpi ne, %7, %8 : vector<16x16xi32>
    %c0_3 = arith.constant 0 : index
    %c0_4 = arith.constant 0 : index
    %10 = vector.load %arg1[%c0_3, %c0_4] : memref<16x1xi32, #tpu.memory_space<vmem>>, vector<16x1xi32>
    %c0_5 = arith.constant 0 : index
    %c0_6 = arith.constant 0 : index
    %11 = vector.load %arg2[%c0_5, %c0_6] : memref<1x16xi32, #tpu.memory_space<vmem>>, vector<1x16xi32>
    %12 = vector.broadcast %10 : vector<16x1xi32> to vector<16x16xi32>
    %13 = vector.broadcast %11 : vector<1x16xi32> to vector<16x16xi32>
    %14 = arith.cmpi eq, %12, %13 : vector<16x16xi32>
    %15 = arith.andi %14, %9 : vector<16x16xi1>
    %cst_7 = arith.constant dense<0xFF800000> : vector<16xf32>
    %16 = vector.multi_reduction <maximumf>, %2, %cst_7 [1] : vector<16x16xf32> to vector<16xf32>
    %17 = vector.shape_cast %16 : vector<16xf32> to vector<16x1xf32>
    %18 = vector.broadcast %17 : vector<16x1xf32> to vector<16x16xf32>
    %19 = arith.subf %2, %18 : vector<16x16xf32>
    %20 = math.exp %19 : vector<16x16xf32>
    %21 = arith.xori %9, %15 : vector<16x16xi1>
    %cst_8 = arith.constant 0.000000e+00 : f32
    %22 = vector.broadcast %cst_8 : f32 to vector<16x16xf32>
    %23 = arith.select %15, %20, %22 : vector<16x16xi1>, vector<16x16xf32>
    %cst_9 = arith.constant dense<0.000000e+00> : vector<16xf32>
    %24 = vector.multi_reduction <add>, %23, %cst_9 [1] : vector<16x16xf32> to vector<16xf32>
    %25 = vector.shape_cast %24 : vector<16xf32> to vector<16x1xf32>
    %cst_10 = arith.constant 0.000000e+00 : f32
    %26 = vector.broadcast %cst_10 : f32 to vector<16x16xf32>
    %27 = arith.select %21, %20, %26 : vector<16x16xi1>, vector<16x16xf32>
    %cst_11 = arith.constant dense<0.000000e+00> : vector<16xf32>
    %28 = vector.multi_reduction <add>, %27, %cst_11 [1] : vector<16x16xf32> to vector<16xf32>
    %29 = vector.shape_cast %28 : vector<16xf32> to vector<16x1xf32>
    %cst_12 = arith.constant 0.000000e+00 : f32
    %30 = vector.broadcast %cst_12 : f32 to vector<16x16xf32>
    %31 = arith.select %15, %19, %30 : vector<16x16xi1>, vector<16x16xf32>
    %cst_13 = arith.constant dense<0.000000e+00> : vector<16xf32>
    %32 = vector.multi_reduction <add>, %31, %cst_13 [1] : vector<16x16xf32> to vector<16xf32>
    %33 = vector.shape_cast %32 : vector<16xf32> to vector<16x1xf32>
    %cst_14 = arith.constant 1.000000e+00 : f32
    %cst_15 = arith.constant 0.000000e+00 : f32
    %34 = vector.broadcast %cst_14 : f32 to vector<16x16xf32>
    %35 = vector.broadcast %cst_15 : f32 to vector<16x16xf32>
    %36 = arith.select %15, %34, %35 : vector<16x16xi1>, vector<16x16xf32>
    %cst_16 = arith.constant dense<0.000000e+00> : vector<16xf32>
    %37 = vector.multi_reduction <add>, %36, %cst_16 [1] : vector<16x16xf32> to vector<16xf32>
    %38 = vector.shape_cast %37 : vector<16xf32> to vector<16x1xf32>
    %39 = arith.addf %25, %29 : vector<16x1xf32>
    %cst_17 = arith.constant 0.239651039 : f32
    %40 = vector.broadcast %cst_17 : f32 to vector<16x1xf32>
    %41 = arith.mulf %40, %25 : vector<16x1xf32>
    %cst_18 = arith.constant 4.17273378 : f32
    %42 = vector.broadcast %cst_18 : f32 to vector<16x1xf32>
    %43 = arith.mulf %42, %29 : vector<16x1xf32>
    %44 = arith.addf %41, %43 : vector<16x1xf32>
    %45 = arith.divf %33, %38 : vector<16x1xf32>
    %46 = math.log %39 : vector<16x1xf32>
    %47 = arith.subf %45, %46 : vector<16x1xf32>
    %cst_19 = arith.constant 1.42857146 : f32
    %48 = vector.broadcast %cst_19 : f32 to vector<16x1xf32>
    %49 = arith.subf %45, %48 : vector<16x1xf32>
    %50 = math.log %44 : vector<16x1xf32>
    %51 = arith.subf %49, %50 : vector<16x1xf32>
    %cst_20 = arith.constant 1.000000e+00 : f32
    %52 = vector.broadcast %cst_20 : f32 to vector<16x1xf32>
    %53 = arith.mulf %52, %51 : vector<16x1xf32>
    %54 = arith.addf %47, %53 : vector<16x1xf32>
    %cst_21 = arith.constant -5.000000e-01 : f32
    %55 = vector.broadcast %cst_21 : f32 to vector<16x1xf32>
    %56 = arith.mulf %55, %54 : vector<16x1xf32>
    %c16_i32_22 = arith.constant 16 : i32
    %57 = vector.broadcast %c16_i32_22 : i32 to vector<16x1xi32>
    %58 = arith.cmpi slt, %6, %57 : vector<16x1xi32>
    %cst_23 = arith.constant 0.000000e+00 : f32
    %59 = vector.broadcast %cst_23 : f32 to vector<16x1xf32>
    %60 = arith.select %58, %56, %59 : vector<16x1xi1>, vector<16x1xf32>
    %61 = vector.shape_cast %60 : vector<16x1xf32> to vector<1x16x1xf32>
    %cst_24 = arith.constant dense<0.000000e+00> : vector<1xf32>
    %62 = vector.multi_reduction <add>, %61, %cst_24 [1, 2] : vector<1x16x1xf32> to vector<1xf32>
    %63 = vector.shape_cast %62 : vector<1xf32> to vector<1x1x1xf32>
    %64 = vector.extract %63[0, 0, 0] : f32 from vector<1x1x1xf32>
    %65 = vector.broadcast %64 : f32 to vector<1x128xf32>
    %c0_25 = arith.constant 0 : index
    %c0_26 = arith.constant 0 : index
    %66 = vector.load %arg5[%c0_25, %c0_26] : memref<1x128xf32, #tpu.memory_space<vmem>>, vector<1x128xf32>
    tpu.vector_store %arg5[%c0_25, %c0_26], %65 {strides = array<i32>} : memref<1x128xf32, #tpu.memory_space<vmem>>, vector<1x128xf32>,
    return
  }
  func.func @transform_0(%arg0: i32) -> (i32, i32) {
    %c0_i32 = arith.constant 0 : i32
    %c0_i32_0 = arith.constant 0 : i32
    return %arg0, %c0_i32 : i32, i32
  }
  func.func @transform_1(%arg0: i32) -> (i32, i32) {
    %c0_i32 = arith.constant 0 : i32
    %c0_i32_0 = arith.constant 0 : i32
    %c0_i32_1 = arith.constant 0 : i32
    return %c0_i32, %c0_i32_0 : i32, i32
  }
  func.func @transform_2(%arg0: i32) -> (i32, i32) {
    %c0_i32 = arith.constant 0 : i32
    %c0_i32_0 = arith.constant 0 : i32
    return %arg0, %c0_i32 : i32, i32
  }
  func.func @transform_3(%arg0: i32) -> (i32, i32) {
    %c0_i32 = arith.constant 0 : i32
    %c0_i32_0 = arith.constant 0 : i32
    %c0_i32_1 = arith.constant 0 : i32
    return %c0_i32, %c0_i32_0 : i32, i32
  }
  func.func @transform_4(%arg0: i32) -> (i32, i32) {
    %c0_i32 = arith.constant 0 : i32
    %c0_i32_0 = arith.constant 0 : i32
    return %c0_i32, %arg0 : i32, i32
  }
}

</mosaic_0001>

<llo_original>
// kernel: tpu_custom_call.1
$region0: #{tpu_custom_call.1}
  #allocation0 [shape = 'u32[]', space=smem, size = 0x4, offset = 0x4, fixed_abs, tag = 'smem constant byte address 0x4 - core index']
  #allocation1 [shape = 'u32[144,128]{1,0:T(1,128)}', space=vmem, size = 0x12000, scoped, tag = 'internal scratch']
  %s0 = inlined_call_operand.vmem [shape: s32[16,1], index: 0, kind: input, shape index: {}]
  %s1 = inlined_call_operand.vmem [shape: s32[1,16], index: 1, kind: input, shape index: {}]
  %s2 = inlined_call_operand.vmem [shape: f32[16,32], index: 2, kind: input, shape index: {}]
  %s3 = inlined_call_operand.hbm [shape: f32[16,32], index: 3, kind: input, shape index: {}]
  %s4 = inlined_call_operand.hbm [shape: f32[1,128], index: 4, kind: output, shape index: {}]
  %s5 = sld [smem:[#allocation0]]
  $region30: #{tpu_custom_call.1} parent=0
    _
  %s7 = ssub.s32 1, %s5
  %s8 = scalar_select 0, %s7, %s5
  $region1: #{tpu_custom_call.1} parent=0
    #allocation2 [shape = 'u8[8192]{0}', space=vmem, size = 0x2000, scoped, tag = 'input window, operand 3, single buffered']
    #allocation3 [shape = 's32[1]{0}', space=sflag, size = 0x4, scoped, tag = 'scoped memory for tpu_custom_call.1']
    #allocation4 [shape = 's32[1]{0}', space=sflag, size = 0x4, scoped, tag = 'scoped memory for tpu_custom_call.1']
    #allocation5 [shape = 'u8[512]{0}', space=vmem, size = 0x400, scoped, tag = 'output window, operand 0, single buffered']
    %9 = vsyncpa [#allocation3], 0
    %10 = vsyncpa [#allocation4], 0
    // Predicated region
    $region2: #{tpu_custom_call.1} parent=1 // pred_check
      _
    $region3: #{tpu_custom_call.1} parent=1 // pred_check_branch
      %12 = sbr.rel (0) target = $region5
    $region4: #{tpu_custom_call.1} parent=1 // pred_region
      _
    $region5: #{tpu_custom_call.1} parent=1 // pred_fallthru
      _
    // Predicated region
    $region6: #{tpu_custom_call.1} parent=1 // pred_check
      _
    $region7: #{tpu_custom_call.1} parent=1 // pred_check_branch
      %14 = sbr.rel (0) target = $region9
    $region8: #{tpu_custom_call.1} parent=1 // pred_region
      _
    $region9: #{tpu_custom_call.1} parent=1 // pred_fallthru
      _
    // Predicated region
    $region10: #{tpu_custom_call.1} parent=1 // pred_check
      _
    $region11: #{tpu_custom_call.1} parent=1 // pred_check_branch
      %16 = sbr.rel (0) target = $region13
    $region12: #{tpu_custom_call.1} parent=1 // pred_region
      _
    $region13: #{tpu_custom_call.1} parent=1 // pred_fallthru
      _
    // Predicated region
    $region14: #{tpu_custom_call.1} parent=1 // pred_check
      _
    $region15: #{tpu_custom_call.1} parent=1 // pred_check_branch
      %18 = sbr.rel (0) target = $region17
    $region16: #{tpu_custom_call.1} parent=1 // pred_region
      %s20 = ssub.s32 256, 256
      %21 = vsyncadd [#allocation3], %s20
      %s22 = sshll.u32 [#allocation2], 4
      %s23 = int_to_ptr.vmem [resolvable:$true] %s22
      %28 = dma.hbm_to_vmem [thread:$0]  %s3, 256, %s23, [#allocation3], 128, 128, 8
    $region17: #{tpu_custom_call.1} parent=1 // pred_fallthru
      _
    // Predicated region
    $region18: #{tpu_custom_call.1} parent=1 // pred_check
      _
    $region19: #{tpu_custom_call.1} parent=1 // pred_check_branch
      %30 = sbr.rel (0) target = $region21
    $region20: #{tpu_custom_call.1} parent=1 // pred_region
      %31 = dma.done [#allocation3], 256
    $region21: #{tpu_custom_call.1} parent=1 // pred_fallthru
      _
    %v32 = vld [vmem:[%s2] sm:$0xff]
    %v33 = vld [vmem:[%s2 + $0x8] sm:$0xff]
    %v34 = vld [vmem:[#allocation2] sm:$0xff]
    %v35 = vld [vmem:[#allocation2 + $0x8] sm:$0xff]
    %vm36 = vcmask 261120
    %v38 = vsel %vm36, %v32, 0
    %v41 = vsel %vm36, %v33, 0
    %v44 = vsel %vm36, %v34, 0
    %v47 = vsel %vm36, %v35, 0
    %49 = vmatprep.subr.mxu0 0.0
    %50 = vmatpush1.xpose.msra.mxu0 %v44
    %51 = vmatprep.subr.mxu0 0.0
    %52 = vmatpush1.xpose.msra.mxu0 %v47
    %53 = vmatprep.subr.mxu0 0.0
    %54 = vmatpush1.xpose.msra.mxu0 0.0
    %55 = vmatprep.subr.mxu0 0.0
    %56 = vmatpush1.xpose.msra.mxu0 0.0
    %57 = vmatprep.subr.mxu0 0.0
    %58 = vmatpush1.xpose.msra.mxu0 0.0
    %59 = vmatprep.subr.mxu0 0.0
    %60 = vmatpush1.xpose.msra.mxu0 0.0
    %61 = vmatprep.subr.mxu0 0.0
    %62 = vmatpush1.xpose.msra.mxu0 0.0
    %63 = vmatprep.subr.mxu0 0.0
    %64 = vmatpush1.xpose.msra.mxu0 0.0
    %65 = vmatprep.subr.mxu0 0.0
    %66 = vmatpush1.xpose.msra.mxu0 0.0
    %67 = vmatprep.subr.mxu0 0.0
    %68 = vmatpush1.xpose.msra.mxu0 0.0
    %69 = vmatprep.subr.mxu0 0.0
    %70 = vmatpush1.xpose.msra.mxu0 0.0
    %71 = vmatprep.subr.mxu0 0.0
    %72 = vmatpush1.xpose.msra.mxu0 0.0
    %73 = vmatprep.subr.mxu0 0.0
    %74 = vmatpush1.xpose.msra.mxu0 0.0
    %75 = vmatprep.subr.mxu0 0.0
    %76 = vmatpush1.xpose.msra.mxu0 0.0
    %77 = vmatprep.subr.mxu0 0.0
    %78 = vmatpush1.xpose.msra.mxu0 0.0
    %79 = vmatprep.subr.mxu0 0.0
    %80 = vmatpush1.xpose.msra.mxu0 0.0
    %81 = vmatprep.subr.mxu0 0.0
    %82 = vmatpush1.xpose.msra.mxu0 0.0
    %83 = vmatprep.subr.mxu0 0.0
    %84 = vmatpush1.xpose.msra.mxu0 0.0
    %85 = vmatprep.subr.mxu0 0.0
    %86 = vmatpush1.xpose.msra.mxu0 0.0
    %87 = vmatprep.subr.mxu0 0.0
    %88 = vmatpush1.xpose.msra.mxu0 0.0
    %89 = vmatprep.subr.mxu0 0.0
    %90 = vmatpush1.xpose.msra.mxu0 0.0
    %91 = vmatprep.subr.mxu0 0.0
    %92 = vmatpush1.xpose.msra.mxu0 0.0
    %93 = vmatprep.subr.mxu0 0.0
    %94 = vmatpush1.xpose.msra.mxu0 0.0
    %95 = vmatprep.subr.mxu0 0.0
    %96 = vmatpush1.xpose.msra.mxu0 0.0
    %97 = vmatprep.subr.mxu0 0.0
    %98 = vmatpush1.xpose.msra.mxu0 0.0
    %99 = vmatprep.subr.mxu0 0.0
    %100 = vmatpush1.xpose.msra.mxu0 0.0
    %101 = vmatprep.subr.mxu0 0.0
    %102 = vmatpush1.xpose.msra.mxu0 0.0
    %103 = vmatprep.subr.mxu0 0.0
    %104 = vmatpush1.xpose.msra.mxu0 0.0
    %105 = vmatprep.subr.mxu0 0.0
    %106 = vmatpush1.xpose.msra.mxu0 0.0
    %107 = vmatprep.subr.mxu0 0.0
    %108 = vmatpush1.xpose.msra.mxu0 0.0
    %109 = vmatprep.subr.mxu0 0.0
    %110 = vmatpush1.xpose.msra.mxu0 0.0
    %111 = vmatprep.subr.mxu0 0.0
    %112 = vmatpush1.xpose.msra.mxu0 0.0
    %113 = vmatprep.mubr.f32.mxu0 0.0
    %114 = vmatmul.mubr.f32.gmra.mrb[0].mxu0 %v38
    %v115 = vpop.f32.mrb[0].mxu0
    %v116 = vadd.f32 0.0, %v115
    %v117 = vpop.f32.mrb[0].mxu0
    %118 = vmatprep.mubr.f32.mxu0 0.0
    %119 = vmatmul.mubr.f32.gmra.mrb[0].mxu0 %v41
    %v120 = vpop.f32.mrb[0].mxu0
    %v121 = vadd.f32 0.0, %v120
    %v122 = vpop.f32.mrb[0].mxu0
    %123 = vdwg.mxu0
    %v124 = vlaneseq
    %v125 = vshrl.u32 %v124, 7
    %v126 = vadd.s32 %v125, 8
    %s127 = smul.u32 0, 16
    %v128 = vstv %s127
    %v129 = vadd.s32 %v125, %v128
    %v130 = vadd.s32 %v126, %v128
    %v131 = vlaneseq
    %v132 = vand.u32 %v131, 127
    %vm133 = vcmp.ne.s32.totalorder %v132, %v129
    %vm134 = vcmp.ne.s32.totalorder %v132, %v130
    %v135 = vld [vmem:[%s0] sm:$0xff]
    %v136 = vld [vmem:[%s0 + $0x8] sm:$0xff]
    %v137 = vld [vmem:[%s1] sm:$0x1]
    %138 = vset.pattern.permute.xlu0 0
    %139 = vperm.xlu0 %138, %v135
    %v140 = vpop.permute.xlu0 %139
    %141 = vset.pattern.permute.xlu0 0
    %142 = vperm.xlu0 %141, %v136
    %v143 = vpop.permute.xlu0 %142
    %v144 = vlaneseq
    %v145 = vshrl.u32 %v144, 7
    %v146 = vsub.s32 0, %v145
    %v147 = vrot.slane %v137, %v146
    %vm148 = vcmp.eq.s32.totalorder %v140, %v147
    %vm149 = vcmp.eq.s32.totalorder %v143, %v147
    %vm150 = vmand %vm148, %vm133
    %vm151 = vmand %vm149, %vm134
    %vm152 = vcmask 130048
    %v153 = vsel %vm152, %v116, -inf
    %154 = vmax.xlane.f32.xlu0 %v153
    %v155 = vpop.xlane.xlu0 %154
    %v156 = vsel %vm152, %v121, -inf
    %157 = vmax.xlane.f32.xlu0 %v156
    %v158 = vpop.xlane.xlu0 %157
    %v159 = vsub.f32 %v116, %v155
    %v160 = vsub.f32 %v121, %v158
    %v161 = vmul.f32 %v159, 1.442695
    %v162 = vpow.pop %v161
    %v163 = vmul.f32 %v160, 1.442695
    %v164 = vpow.pop %v163
    %vm165 = vmxor %vm133, %vm150
    %vm166 = vmxor %vm134, %vm151
    %v167 = vsel %vm150, %v162, 0.0
    %v168 = vsel %vm151, %v164, 0.0
    %v169 = vsel %vm152, %v167, 0.0
    %170 = vadd.xlane.f32.xlu0 %v169
    %v171 = vpop.xlane.xlu0 %170
    %v172 = vsel %vm152, %v168, 0.0
    %173 = vadd.xlane.f32.xlu0 %v172
    %v174 = vpop.xlane.xlu0 %173
    %v175 = vsel %vm165, %v162, 0.0
    %v176 = vsel %vm166, %v164, 0.0
    %v177 = vsel %vm152, %v175, 0.0
    %178 = vadd.xlane.f32.xlu0 %v177
    %v179 = vpop.xlane.xlu0 %178
    %v180 = vsel %vm152, %v176, 0.0
    %181 = vadd.xlane.f32.xlu0 %v180
    %v182 = vpop.xlane.xlu0 %181
    %v183 = vsel %vm150, %v159, 0.0
    %v184 = vsel %vm151, %v160, 0.0
    %v185 = vsel %vm152, %v183, 0.0
    %186 = vadd.xlane.f32.xlu0 %v185
    %v187 = vpop.xlane.xlu0 %186
    %v188 = vsel %vm152, %v184, 0.0
    %189 = vadd.xlane.f32.xlu0 %v188
    %v190 = vpop.xlane.xlu0 %189
    %v191 = vsel %vm150, 1.0, 0.0
    %v192 = vsel %vm151, 1.0, 0.0
    %v193 = vsel %vm152, %v191, 0.0
    %194 = vadd.xlane.f32.xlu0 %v193
    %v195 = vpop.xlane.xlu0 %194
    %v196 = vsel %vm152, %v192, 0.0
    %197 = vadd.xlane.f32.xlu0 %v196
    %v198 = vpop.xlane.xlu0 %197
    %v199 = vadd.f32 %v171, %v179
    %v200 = vadd.f32 %v174, %v182
    %v201 = vmul.f32 %v171, 0.23965104
    %v202 = vmul.f32 %v174, 0.23965104
    %v203 = vmul.f32 %v179, 4.172734
    %v204 = vmul.f32 %v182, 4.172734
    %v205 = vadd.f32 %v201, %v203
    %v206 = vadd.f32 %v202, %v204
    %v207 = vrcp.pop %v195
    %v208 = vmul.f32 %v187, %v207
    %v209 = vrcp.pop %v198
    %v210 = vmul.f32 %v190, %v209
    %v211 = vlog2.pop %v199
    %v212 = vmul.f32 %v211, 0.6931472
    %v213 = vlog2.pop %v200
    %v214 = vmul.f32 %v213, 0.6931472
    %v215 = vsub.f32 %v208, %v212
    %v216 = vsub.f32 %v210, %v214
    %v217 = vsub.f32 %v208, 1.4285715
    %v218 = vsub.f32 %v210, 1.4285715
    %v219 = vlog2.pop %v205
    %v220 = vmul.f32 %v219, 0.6931472
    %v221 = vlog2.pop %v206
    %v222 = vmul.f32 %v221, 0.6931472
    %v223 = vsub.f32 %v217, %v220
    %v224 = vsub.f32 %v218, %v222
    %v225 = vadd.f32 %v215, %v223
    %v226 = vadd.f32 %v216, %v224
    %v227 = vmul.f32 %v225, -0.5
    %v228 = vmul.f32 %v226, -0.5
    %vm229 = vcmp.lt.s32.totalorder %v129, 16
    %vm230 = vcmp.lt.s32.totalorder %v130, 16
    %v231 = vsel %vm229, %v227, 0.0
    %v232 = vsel %vm230, %v228, 0.0
    %vm233 = vcmask 7168
    %v234 = vsel %vm233, %v231, 0.0
    %v235 = vsel %vm233, %v232, 0.0
    %v236 = vadd.f32 %v234, %v235
    %237 = vadd.xlane.f32.xlu0 %v236
    %v238 = vpop.xlane.xlu0 %237
    %v239 = vrot.slane %v238, 4
    %v240 = vadd.f32 %v238, %v239
    %v241 = vrot.slane %v240, 2
    %v242 = vadd.f32 %v240, %v241
    %v243 = vrot.slane %v242, 1
    %v244 = vadd.f32 %v242, %v243
    %s245 = vtos %v244
    %v246 = vstv %s245
    %247 = vst [vmem:[#allocation5] sm:$0x1] %v246
    // Predicated region
    $region22: #{tpu_custom_call.1} parent=1 // pred_check
      _
    $region23: #{tpu_custom_call.1} parent=1 // pred_check_branch
      %249 = sbr.rel (0) target = $region25
    $region24: #{tpu_custom_call.1} parent=1 // pred_region
      %s251 = ssub.s32 16, 16
      %252 = vsyncadd [#allocation4], %s251
      %s254 = sshll.u32 [#allocation5], 4
      %s255 = int_to_ptr.vmem [resolvable:$true] %s254
      %257 = dma.vmem_to_hbm [thread:$0]  %s255, 16, %s4, [#allocation4]
    $region25: #{tpu_custom_call.1} parent=1 // pred_fallthru
      _
    // Predicated region
    $region26: #{tpu_custom_call.1} parent=1 // pred_check
      _
    $region27: #{tpu_custom_call.1} parent=1 // pred_check_branch
      %259 = sbr.rel (0) target = $region29
    $region28: #{tpu_custom_call.1} parent=1 // pred_region
      %260 = dma.done [#allocation4], 16
    $region29: #{tpu_custom_call.1} parent=1 // pred_fallthru
      _
    %261 = vsyncpa [#allocation3], 1
    %262 = vsyncpa [#allocation4], 1

</llo_original>
